<compile_context>
chip_gen: v7x
topology: tpu7x:2x2x1
jax: 0.10.0
libtpu: 0.0.40
codegen_flags: <defaults>
</compile_context>

<pallas_src>
import jax
import jax.numpy as jnp
import numpy as np
from jax.experimental import pallas as pl
from jax.experimental.pallas import tpu as pltpu


def _transition_up_kernel(xyz1t_ref, xyz2_ref, p1_ref, p2_ref,
                          w1_ref, t1_ref, w2_ref, t2_ref,
                          out_ref, f1_ref):
    j = pl.program_id(1)

    # ---- branch 1 (coarse points): computed once per batch element, held in
    # VMEM scratch across all N2 tiles (grid axis 1 is "arbitrary" => sequential).
    @pl.when(j == 0)
    def _():
        f1 = jnp.dot(p1_ref[0], w1_ref[...],
                     preferred_element_type=jnp.float32) + t1_ref[...]
        f1_ref[...] = jnp.maximum(f1, 0.0).astype(jnp.bfloat16)

    # ---- branch 2 (dense points), current N2 tile.
    f2 = jnp.dot(p2_ref[0], w2_ref[...],
                 preferred_element_type=jnp.float32) + t2_ref[...]
    f2 = jnp.maximum(f2, 0.0)                                  # (TN2, dim_out) f32

    # ---- pairwise squared distances on the VPU (exactly >= 0, no cancellation).
    x1 = xyz1t_ref[0]                                          # (3, N1)   f32
    x2 = xyz2_ref[0]                                           # (TN2, 3)  f32
    d = None
    for c in range(3):
        diff = x2[:, c:c + 1] - x1[c:c + 1, :]                 # (TN2, N1)
        sq = diff * diff
        d = sq if d is None else d + sq

    # ---- 3-NN inverse-distance weights: one cross-lane reduction per neighbour.
    n1 = x1.shape[1]
    idx_bits = max(1, (n1 - 1).bit_length())
    hi_mask = jnp.int32(~((1 << idx_bits) - 1))
    lane_idx = jax.lax.broadcasted_iota(jnp.int32, d.shape, 1)
    # d >= 0 -> its f32 bit pattern is monotone as int32. Replacing the low
    # mantissa bits with the lane index makes every key unique, so a single
    # min() yields (distance, argmin) with ties broken to the lowest index.
    keys = (pltpu.bitcast(d, jnp.int32) & hi_mask) | lane_idx
    int_max = jnp.int32(2 ** 31 - 1)

    w_acc = jnp.zeros(d.shape, jnp.float32)
    for _ in range(3):
        kmin = jnp.min(keys, axis=-1, keepdims=True)           # (TN2, 1) single XLU reduce
        sel = keys == kmin                                      # exact one-hot
        dmin = pltpu.bitcast(kmin & hi_mask, jnp.float32)       # recovered distance
        # Tiny (TN2, 1) tensors: exact divide keeps validation tight; switch to
        # pl.reciprocal(..., approx=True) if tolerance allows.
        recip = 1.0 / (dmin + 1e-8)
        w_acc = w_acc + jnp.where(sel, recip, 0.0)
        keys = jnp.where(sel, int_max, keys)

    inv_norm = 1.0 / jnp.sum(w_acc, axis=-1, keepdims=True)     # (TN2, 1)

    # Deferred normalization: scale the (TN2, dim_out) result, not the (TN2, N1) weights.
    interp = jnp.dot(w_acc.astype(jnp.bfloat16), f1_ref[...],
                     preferred_element_type=jnp.float32)        # (TN2, dim_out)
    out_ref[0] = (interp * inv_norm + f2).astype(out_ref.dtype)


def _pick_tile(n, target=512):
    """Largest multiple-of-8 divisor of n that is <= target (falls back to n)."""
    if n <= target:
        return n
    t = target - (target % 8)
    while t >= 8:
        if n % t == 0:
            return t
        t -= 8
    return n


def transition_up(xyz1, points1, xyz2, points2, params, *, tile_n2=512):
    B, N1, _ = xyz1.shape
    _, N2, _ = xyz2.shape
    dim1 = points1.shape[-1]
    dim2 = points2.shape[-1]
    dim_out = params["w1"].shape[1]
    assert N1 >= 3, "3-NN interpolation requires at least 3 coarse points"

    # Fold Linear bias + inference-mode BatchNorm affine into the weights:
    #   y = (x W + b) * s + t  ==  x (W * s) + (b * s + t)
    def fold(w, b, s, t):
        return (w * s).astype(jnp.bfloat16), (b * s + t).astype(jnp.float32)

    w1, t1 = fold(params["w1"], params["b1"], params["s1"], params["t1"])
    w2, t2 = fold(params["w2"], params["b2"], params["s2"], params["t2"])

    # bf16 features for the MXU (half the DMA bytes / VMEM, ~2x MXU rate);
    # coordinates stay f32 for the distance computation.
    p1 = points1.astype(jnp.bfloat16)
    p2 = points2.astype(jnp.bfloat16)
    xyz1t = jnp.transpose(xyz1, (0, 2, 1))                     # (B, 3, N1) lane-dense rows

    tn2 = _pick_tile(N2, tile_n2)
    n_tiles = N2 // tn2
    grid = (B, n_tiles)

    def whole(shape):
        return pl.BlockSpec(shape, lambda b, j: (0,) * len(shape))

    in_specs = [
        pl.BlockSpec((1, 3, N1), lambda b, j: (b, 0, 0)),       # xyz1^T  (per batch)
        pl.BlockSpec((1, tn2, 3), lambda b, j: (b, j, 0)),      # xyz2 tile
        pl.BlockSpec((1, N1, dim1), lambda b, j: (b, 0, 0)),    # points1 (per batch)
        pl.BlockSpec((1, tn2, dim2), lambda b, j: (b, j, 0)),   # points2 tile
        whole((dim1, dim_out)), whole((1, dim_out)),            # W1', t1'
        whole((dim2, dim_out)), whole((1, dim_out)),            # W2', t2'
    ]
    out_specs = pl.BlockSpec((1, tn2, dim_out), lambda b, j: (b, j, 0))

    return pl.pallas_call(
        _transition_up_kernel,
        out_shape=jax.ShapeDtypeStruct((B, N2, dim_out), jnp.float32),
        grid=grid,
        in_specs=in_specs,
        out_specs=out_specs,
        scratch_shapes=[pltpu.VMEM((N1, dim_out), jnp.bfloat16)],  # resident f1
        compiler_params=pltpu.CompilerParams(
            # Axis 1 must stay "arbitrary": the f1 scratch written at j == 0 is
            # reused by later N2 tiles of the same batch element.
            dimension_semantics=("parallel", "arbitrary"),
            # With N2 tiling the working set (~3 * tn2*N1*4 B + double-buffered
            # feature tiles) fits comfortably under this on v5e/v6e/v7x.
            vmem_limit_bytes=32 * 1024 * 1024,
        ),
    )(xyz1t, xyz2, p1, p2, w1, t1, w2, t2)


def transition_up_ref(xyz1, points1, xyz2, points2, params):
    """Pure-JAX reference (mirrors the kernel's bf16 matmul-input precision)."""
    def fc(p, w, b, s, t):
        wf = (w * s).astype(jnp.bfloat16)
        tf = b * s + t
        y = jnp.dot(p.astype(jnp.bfloat16), wf, preferred_element_type=jnp.float32)
        return jnp.maximum(y + tf, 0.0)

    f1 = fc(points1, params["w1"], params["b1"], params["s1"], params["t1"])
    f2 = fc(points2, params["w2"], params["b2"], params["s2"], params["t2"])

    d = jnp.sum((xyz2[:, :, None, :] - xyz1[:, None, :, :]) ** 2, axis=-1)   # (B,N2,N1)
    neg_top, idx = jax.lax.top_k(-d, 3)                                       # (B,N2,3)
    dists = -neg_top
    recip = 1.0 / (dists + 1e-8)
    w = recip / jnp.sum(recip, axis=-1, keepdims=True)                        # (B,N2,3)
    gathered = jax.vmap(lambda f, i: f[i])(f1, idx)                           # (B,N2,3,do)
    interp = jnp.sum(gathered * w[..., None], axis=2)                         # (B,N2,do)
    return interp + f2


def make_params(key, dim1, dim2, dim_out, eps=1e-5):
    ks = jax.random.split(key, 12)

    def bn_affine(kg, kb, km, kv):
        gamma = jax.random.normal(kg, (1, dim_out), jnp.float32) * 0.1 + 1.0
        beta = jax.random.normal(kb, (1, dim_out), jnp.float32) * 0.1
        rm = jax.random.normal(km, (1, dim_out), jnp.float32) * 0.1
        rv = jnp.abs(jax.random.normal(kv, (1, dim_out), jnp.float32)) * 0.1 + 0.9
        scale = gamma / jnp.sqrt(rv + eps)
        shift = beta - rm * scale
        return scale, shift

    # NOTE: weights stored as (in_features, out_features), i.e. PyTorch W^T.
    w1 = jax.random.normal(ks[0], (dim1, dim_out), jnp.float32) * (1.0 / np.sqrt(dim1))
    b1 = jax.random.normal(ks[1], (1, dim_out), jnp.float32) * 0.05
    s1, t1 = bn_affine(ks[2], ks[3], ks[4], ks[5])
    w2 = jax.random.normal(ks[6], (dim2, dim_out), jnp.float32) * (1.0 / np.sqrt(dim2))
    b2 = jax.random.normal(ks[7], (1, dim_out), jnp.float32) * 0.05
    s2, t2 = bn_affine(ks[8], ks[9], ks[10], ks[11])
    return dict(w1=w1, b1=b1, s1=s1, t1=t1, w2=w2, b2=b2, s2=s2, t2=t2)


if __name__ == "__main__":
    B, N1, N2 = 2, 8, 16
    dim1, dim2, dim_out = 16, 32, 32

    key = jax.random.PRNGKey(0)
    k = jax.random.split(key, 5)
    xyz1 = jax.random.normal(k[0], (B, N1, 3), jnp.float32)
    points1 = jax.random.normal(k[1], (B, N1, dim1), jnp.float32)
    xyz2 = jax.random.normal(k[2], (B, N2, 3), jnp.float32)
    points2 = jax.random.normal(k[3], (B, N2, dim2), jnp.float32)
    params = make_params(k[4], dim1, dim2, dim_out)

    out = jax.block_until_ready(transition_up(xyz1, points1, xyz2, points2, params))

    ref = transition_up_ref(xyz1, points1, xyz2, points2, params)
    assert out.shape == (B, N2, dim_out)
    # Loose-ish tolerance: kernel rounds the f1 scratch and interpolation
    # weights to bf16 (MXU inputs); the reference keeps those in f32.
    assert jnp.allclose(out, ref, rtol=2e-2, atol=2e-2), float(jnp.max(jnp.abs(out - ref)))

    print("KERNEL_OK")
</pallas_src>

<mosaic_0001>
module attributes {stable_mosaic.version = 11 : i64} {
  func.func @_transition_up_kernel(%arg0: i32, %arg1: i32, %arg2: memref<1x3x8xf32, #tpu.memory_space<vmem>>, %arg3: memref<1x16x3xf32, #tpu.memory_space<vmem>>, %arg4: memref<1x8x16xbf16, #tpu.memory_space<vmem>>, %arg5: memref<1x16x32xbf16, #tpu.memory_space<vmem>>, %arg6: memref<16x32xbf16, #tpu.memory_space<vmem>>, %arg7: memref<1x32xf32, #tpu.memory_space<vmem>>, %arg8: memref<32x32xbf16, #tpu.memory_space<vmem>>, %arg9: memref<1x32xf32, #tpu.memory_space<vmem>>, %arg10: memref<1x16x32xf32, #tpu.memory_space<vmem>>, %arg11: memref<8x32xbf16, #tpu.memory_space<vmem>>) attributes {dimension_semantics = [#tpu.dimension_semantics<parallel>, #tpu.dimension_semantics<arbitrary>], iteration_bounds = array<i64: 2, 1>, scalar_prefetch = 0 : i64, scratch_operands = 1 : i64, tpu.core_type = #tpu.core_type<tc>, window_params = [{transform_indices = @transform_0, window_bounds = array<i64: 1, 3, 8>}, {transform_indices = @transform_1, window_bounds = array<i64: 1, 16, 3>}, {transform_indices = @transform_2, window_bounds = array<i64: 1, 8, 16>}, {transform_indices = @transform_3, window_bounds = array<i64: 1, 16, 32>}, {pipeline_mode = #tpu.pipeline_mode<synchronous>, transform_indices = @transform_4, window_bounds = array<i64: 16, 32>}, {pipeline_mode = #tpu.pipeline_mode<synchronous>, transform_indices = @transform_5, window_bounds = array<i64: 1, 32>}, {pipeline_mode = #tpu.pipeline_mode<synchronous>, transform_indices = @transform_6, window_bounds = array<i64: 32, 32>}, {pipeline_mode = #tpu.pipeline_mode<synchronous>, transform_indices = @transform_7, window_bounds = array<i64: 1, 32>}, {transform_indices = @transform_8, window_bounds = array<i64: 1, 16, 32>}]} {
    %c0_i32 = arith.constant 0 : i32
    %0 = arith.cmpi eq, %arg1, %c0_i32 : i32
    %1 = arith.extui %0 : i1 to i32
    %c0_i32_0 = arith.constant 0 : i32
    %2 = arith.cmpi ne, %1, %c0_i32_0 : i32
    scf.if %2 {
      %c0_39 = arith.constant 0 : index
      %c0_40 = arith.constant 0 : index
      %c0_41 = arith.constant 0 : index
      %107 = vector.load %arg4[%c0_39, %c0_40, %c0_41] : memref<1x8x16xbf16, #tpu.memory_space<vmem>>, vector<1x8x16xbf16>
      %108 = vector.shape_cast %107 : vector<1x8x16xbf16> to vector<8x16xbf16>
      %c0_42 = arith.constant 0 : index
      %c0_43 = arith.constant 0 : index
      %109 = vector.load %arg6[%c0_42, %c0_43] : memref<16x32xbf16, #tpu.memory_space<vmem>>, vector<16x32xbf16>
      %cst_44 = arith.constant dense<0.000000e+00> : vector<8x32xf32>
      %110 = tpu.matmul %108, %109, %cst_44 {dimension_numbers = #tpu.dot_dimension_numbers<[1], [0], [0], [1], [0, 0, 1, 1], [], []>} : vector<8x16xbf16>, vector<16x32xbf16>, vector<8x32xf32> -> vector<8x32xf32>
      %c0_45 = arith.constant 0 : index
      %c0_46 = arith.constant 0 : index
      %111 = vector.load %arg7[%c0_45, %c0_46] : memref<1x32xf32, #tpu.memory_space<vmem>>, vector<1x32xf32>
      %112 = vector.broadcast %111 : vector<1x32xf32> to vector<8x32xf32>
      %113 = arith.addf %110, %112 : vector<8x32xf32>
      %cst_47 = arith.constant 0.000000e+00 : f32
      %114 = vector.broadcast %cst_47 : f32 to vector<8x32xf32>
      %115 = arith.maximumf %113, %114 : vector<8x32xf32>
      %116 = arith.truncf %115 : vector<8x32xf32> to vector<8x32xbf16>
      %c0_48 = arith.constant 0 : index
      %c0_49 = arith.constant 0 : index
      %117 = vector.load %arg11[%c0_48, %c0_49] : memref<8x32xbf16, #tpu.memory_space<vmem>>, vector<8x32xbf16>
      tpu.vector_store %arg11[%c0_48, %c0_49], %116 {strides = array<i32>} : memref<8x32xbf16, #tpu.memory_space<vmem>>, vector<8x32xbf16>,
    } else {
    }
    %c0 = arith.constant 0 : index
    %c0_1 = arith.constant 0 : index
    %c0_2 = arith.constant 0 : index
    %3 = vector.load %arg5[%c0, %c0_1, %c0_2] : memref<1x16x32xbf16, #tpu.memory_space<vmem>>, vector<1x16x32xbf16>
    %4 = vector.shape_cast %3 : vector<1x16x32xbf16> to vector<16x32xbf16>
    %c0_3 = arith.constant 0 : index
    %c0_4 = arith.constant 0 : index
    %5 = vector.load %arg8[%c0_3, %c0_4] : memref<32x32xbf16, #tpu.memory_space<vmem>>, vector<32x32xbf16>
    %cst = arith.constant dense<0.000000e+00> : vector<16x32xf32>
    %6 = tpu.matmul %4, %5, %cst {dimension_numbers = #tpu.dot_dimension_numbers<[1], [0], [0], [1], [0, 0, 1, 1], [], []>} : vector<16x32xbf16>, vector<32x32xbf16>, vector<16x32xf32> -> vector<16x32xf32>
    %c0_5 = arith.constant 0 : index
    %c0_6 = arith.constant 0 : index
    %7 = vector.load %arg9[%c0_5, %c0_6] : memref<1x32xf32, #tpu.memory_space<vmem>>, vector<1x32xf32>
    %8 = vector.broadcast %7 : vector<1x32xf32> to vector<16x32xf32>
    %9 = arith.addf %6, %8 : vector<16x32xf32>
    %cst_7 = arith.constant 0.000000e+00 : f32
    %10 = vector.broadcast %cst_7 : f32 to vector<16x32xf32>
    %11 = arith.maximumf %9, %10 : vector<16x32xf32>
    %c0_8 = arith.constant 0 : index
    %c0_9 = arith.constant 0 : index
    %c0_10 = arith.constant 0 : index
    %12 = vector.load %arg2[%c0_8, %c0_9, %c0_10] : memref<1x3x8xf32, #tpu.memory_space<vmem>>, vector<1x3x8xf32>
    %13 = vector.shape_cast %12 : vector<1x3x8xf32> to vector<3x8xf32>
    %c0_11 = arith.constant 0 : index
    %c0_12 = arith.constant 0 : index
    %c0_13 = arith.constant 0 : index
    %14 = vector.load %arg3[%c0_11, %c0_12, %c0_13] : memref<1x16x3xf32, #tpu.memory_space<vmem>>, vector<1x16x3xf32>
    %15 = vector.shape_cast %14 : vector<1x16x3xf32> to vector<16x3xf32>
    %16 = vector.extract_strided_slice %15 {offsets = [0, 0], sizes = [16, 1], strides = [1, 1]} : vector<16x3xf32> to vector<16x1xf32>
    %17 = vector.extract_strided_slice %13 {offsets = [0, 0], sizes = [1, 8], strides = [1, 1]} : vector<3x8xf32> to vector<1x8xf32>
    %18 = vector.broadcast %16 : vector<16x1xf32> to vector<16x8xf32>
    %19 = vector.broadcast %17 : vector<1x8xf32> to vector<16x8xf32>
    %20 = arith.subf %18, %19 : vector<16x8xf32>
    %21 = arith.mulf %20, %20 : vector<16x8xf32>
    %22 = vector.extract_strided_slice %15 {offsets = [0, 1], sizes = [16, 1], strides = [1, 1]} : vector<16x3xf32> to vector<16x1xf32>
    %23 = vector.extract_strided_slice %13 {offsets = [1, 0], sizes = [1, 8], strides = [1, 1]} : vector<3x8xf32> to vector<1x8xf32>
    %24 = vector.broadcast %22 : vector<16x1xf32> to vector<16x8xf32>
    %25 = vector.broadcast %23 : vector<1x8xf32> to vector<16x8xf32>
    %26 = arith.subf %24, %25 : vector<16x8xf32>
    %27 = arith.mulf %26, %26 : vector<16x8xf32>
    %28 = arith.addf %21, %27 : vector<16x8xf32>
    %29 = vector.extract_strided_slice %15 {offsets = [0, 2], sizes = [16, 1], strides = [1, 1]} : vector<16x3xf32> to vector<16x1xf32>
    %30 = vector.extract_strided_slice %13 {offsets = [2, 0], sizes = [1, 8], strides = [1, 1]} : vector<3x8xf32> to vector<1x8xf32>
    %31 = vector.broadcast %29 : vector<16x1xf32> to vector<16x8xf32>
    %32 = vector.broadcast %30 : vector<1x8xf32> to vector<16x8xf32>
    %33 = arith.subf %31, %32 : vector<16x8xf32>
    %34 = arith.mulf %33, %33 : vector<16x8xf32>
    %35 = arith.addf %28, %34 : vector<16x8xf32>
    %36 = tpu.iota {dimensions = array<i32: 1>} : vector<16x8xi32>
    %37 = tpu.bitcast %35 : vector<16x8xf32> -> vector<16x8xi32>
    %c-8_i32 = arith.constant -8 : i32
    %38 = vector.broadcast %c-8_i32 : i32 to vector<16x8xi32>
    %39 = arith.andi %37, %38 : vector<16x8xi32>
    %40 = arith.ori %39, %36 : vector<16x8xi32>
    %cst_14 = arith.constant 0.000000e+00 : f32
    %41 = vector.broadcast %cst_14 : f32 to vector<16x8xf32>
    %cst_15 = arith.constant dense<2147483647> : vector<16xi32>
    %42 = vector.multi_reduction <minsi>, %40, %cst_15 [1] : vector<16x8xi32> to vector<16xi32>
    %43 = vector.shape_cast %42 : vector<16xi32> to vector<16x1xi32>
    %44 = vector.broadcast %43 : vector<16x1xi32> to vector<16x8xi32>
    %45 = arith.cmpi eq, %40, %44 : vector<16x8xi32>
    %c-8_i32_16 = arith.constant -8 : i32
    %46 = vector.broadcast %c-8_i32_16 : i32 to vector<16x1xi32>
    %47 = arith.andi %43, %46 : vector<16x1xi32>
    %48 = tpu.bitcast %47 : vector<16x1xi32> -> vector<16x1xf32>
    %cst_17 = arith.constant 9.99999993E-9 : f32
    %49 = vector.broadcast %cst_17 : f32 to vector<16x1xf32>
    %50 = arith.addf %48, %49 : vector<16x1xf32>
    %cst_18 = arith.constant 1.000000e+00 : f32
    %51 = vector.broadcast %cst_18 : f32 to vector<16x1xf32>
    %52 = arith.divf %51, %50 : vector<16x1xf32>
    %cst_19 = arith.constant 0.000000e+00 : f32
    %53 = vector.shape_cast %52 : vector<16x1xf32> to vector<16x1xf32>
    %54 = vector.broadcast %53 : vector<16x1xf32> to vector<16x8xf32>
    %55 = vector.broadcast %cst_19 : f32 to vector<16x8xf32>
    %56 = arith.select %45, %54, %55 : vector<16x8xi1>, vector<16x8xf32>
    %57 = arith.addf %41, %56 : vector<16x8xf32>
    %c2147483647_i32 = arith.constant 2147483647 : i32
    %58 = vector.broadcast %c2147483647_i32 : i32 to vector<16x8xi32>
    %59 = arith.select %45, %58, %40 : vector<16x8xi1>, vector<16x8xi32>
    %cst_20 = arith.constant dense<2147483647> : vector<16xi32>
    %60 = vector.multi_reduction <minsi>, %59, %cst_20 [1] : vector<16x8xi32> to vector<16xi32>
    %61 = vector.shape_cast %60 : vector<16xi32> to vector<16x1xi32>
    %62 = vector.broadcast %61 : vector<16x1xi32> to vector<16x8xi32>
    %63 = arith.cmpi eq, %59, %62 : vector<16x8xi32>
    %c-8_i32_21 = arith.constant -8 : i32
    %64 = vector.broadcast %c-8_i32_21 : i32 to vector<16x1xi32>
    %65 = arith.andi %61, %64 : vector<16x1xi32>
    %66 = tpu.bitcast %65 : vector<16x1xi32> -> vector<16x1xf32>
    %cst_22 = arith.constant 9.99999993E-9 : f32
    %67 = vector.broadcast %cst_22 : f32 to vector<16x1xf32>
    %68 = arith.addf %66, %67 : vector<16x1xf32>
    %cst_23 = arith.constant 1.000000e+00 : f32
    %69 = vector.broadcast %cst_23 : f32 to vector<16x1xf32>
    %70 = arith.divf %69, %68 : vector<16x1xf32>
    %cst_24 = arith.constant 0.000000e+00 : f32
    %71 = vector.shape_cast %70 : vector<16x1xf32> to vector<16x1xf32>
    %72 = vector.broadcast %71 : vector<16x1xf32> to vector<16x8xf32>
    %73 = vector.broadcast %cst_24 : f32 to vector<16x8xf32>
    %74 = arith.select %63, %72, %73 : vector<16x8xi1>, vector<16x8xf32>
    %75 = arith.addf %57, %74 : vector<16x8xf32>
    %c2147483647_i32_25 = arith.constant 2147483647 : i32
    %76 = vector.broadcast %c2147483647_i32_25 : i32 to vector<16x8xi32>
    %77 = arith.select %63, %76, %59 : vector<16x8xi1>, vector<16x8xi32>
    %cst_26 = arith.constant dense<2147483647> : vector<16xi32>
    %78 = vector.multi_reduction <minsi>, %77, %cst_26 [1] : vector<16x8xi32> to vector<16xi32>
    %79 = vector.shape_cast %78 : vector<16xi32> to vector<16x1xi32>
    %80 = vector.broadcast %79 : vector<16x1xi32> to vector<16x8xi32>
    %81 = arith.cmpi eq, %77, %80 : vector<16x8xi32>
    %c-8_i32_27 = arith.constant -8 : i32
    %82 = vector.broadcast %c-8_i32_27 : i32 to vector<16x1xi32>
    %83 = arith.andi %79, %82 : vector<16x1xi32>
    %84 = tpu.bitcast %83 : vector<16x1xi32> -> vector<16x1xf32>
    %cst_28 = arith.constant 9.99999993E-9 : f32
    %85 = vector.broadcast %cst_28 : f32 to vector<16x1xf32>
    %86 = arith.addf %84, %85 : vector<16x1xf32>
    %cst_29 = arith.constant 1.000000e+00 : f32
    %87 = vector.broadcast %cst_29 : f32 to vector<16x1xf32>
    %88 = arith.divf %87, %86 : vector<16x1xf32>
    %cst_30 = arith.constant 0.000000e+00 : f32
    %89 = vector.shape_cast %88 : vector<16x1xf32> to vector<16x1xf32>
    %90 = vector.broadcast %89 : vector<16x1xf32> to vector<16x8xf32>
    %91 = vector.broadcast %cst_30 : f32 to vector<16x8xf32>
    %92 = arith.select %81, %90, %91 : vector<16x8xi1>, vector<16x8xf32>
    %93 = arith.addf %75, %92 : vector<16x8xf32>
    %cst_31 = arith.constant dense<0.000000e+00> : vector<16xf32>
    %94 = vector.multi_reduction <add>, %93, %cst_31 [1] : vector<16x8xf32> to vector<16xf32>
    %95 = vector.shape_cast %94 : vector<16xf32> to vector<16x1xf32>
    %cst_32 = arith.constant 1.000000e+00 : f32
    %96 = vector.broadcast %cst_32 : f32 to vector<16x1xf32>
    %97 = arith.divf %96, %95 : vector<16x1xf32>
    %98 = arith.truncf %93 : vector<16x8xf32> to vector<16x8xbf16>
    %c0_33 = arith.constant 0 : index
    %c0_34 = arith.constant 0 : index
    %99 = vector.load %arg11[%c0_33, %c0_34] : memref<8x32xbf16, #tpu.memory_space<vmem>>, vector<8x32xbf16>
    %cst_35 = arith.constant dense<0.000000e+00> : vector<16x32xf32>
    %100 = tpu.matmul %98, %99, %cst_35 {dimension_numbers = #tpu.dot_dimension_numbers<[1], [0], [0], [1], [0, 0, 1, 1], [], []>} : vector<16x8xbf16>, vector<8x32xbf16>, vector<16x32xf32> -> vector<16x32xf32>
    %101 = vector.broadcast %97 : vector<16x1xf32> to vector<16x32xf32>
    %102 = arith.mulf %100, %101 : vector<16x32xf32>
    %103 = arith.addf %102, %11 : vector<16x32xf32>
    %c0_36 = arith.constant 0 : index
    %c0_37 = arith.constant 0 : index
    %c0_38 = arith.constant 0 : index
    %104 = vector.load %arg10[%c0_36, %c0_37, %c0_38] : memref<1x16x32xf32, #tpu.memory_space<vmem>>, vector<1x16x32xf32>
    %105 = vector.shape_cast %104 : vector<1x16x32xf32> to vector<16x32xf32>
    %106 = vector.shape_cast %103 : vector<16x32xf32> to vector<1x16x32xf32>
    tpu.vector_store %arg10[%c0_36, %c0_37, %c0_38], %106 {strides = array<i32>} : memref<1x16x32xf32, #tpu.memory_space<vmem>>, vector<1x16x32xf32>,
    return
  }
  func.func @transform_0(%arg0: i32, %arg1: i32) -> (i32, i32, i32) {
    %c0_i32 = arith.constant 0 : i32
    %c0_i32_0 = arith.constant 0 : i32
    %c0_i32_1 = arith.constant 0 : i32
    return %arg0, %c0_i32, %c0_i32_0 : i32, i32, i32
  }
  func.func @transform_1(%arg0: i32, %arg1: i32) -> (i32, i32, i32) {
    %c0_i32 = arith.constant 0 : i32
    %c0_i32_0 = arith.constant 0 : i32
    return %arg0, %arg1, %c0_i32 : i32, i32, i32
  }
  func.func @transform_2(%arg0: i32, %arg1: i32) -> (i32, i32, i32) {
    %c0_i32 = arith.constant 0 : i32
    %c0_i32_0 = arith.constant 0 : i32
    %c0_i32_1 = arith.constant 0 : i32
    return %arg0, %c0_i32, %c0_i32_0 : i32, i32, i32
  }
  func.func @transform_3(%arg0: i32, %arg1: i32) -> (i32, i32, i32) {
    %c0_i32 = arith.constant 0 : i32
    %c0_i32_0 = arith.constant 0 : i32
    return %arg0, %arg1, %c0_i32 : i32, i32, i32
  }
  func.func @transform_4(%arg0: i32, %arg1: i32) -> (i32, i32) {
    %c0_i32 = arith.constant 0 : i32
    %c0_i32_0 = arith.constant 0 : i32
    %c0_i32_1 = arith.constant 0 : i32
    return %c0_i32, %c0_i32_0 : i32, i32
  }
  func.func @transform_5(%arg0: i32, %arg1: i32) -> (i32, i32) {
    %c0_i32 = arith.constant 0 : i32
    %c0_i32_0 = arith.constant 0 : i32
    %c0_i32_1 = arith.constant 0 : i32
    return %c0_i32, %c0_i32_0 : i32, i32
  }
  func.func @transform_6(%arg0: i32, %arg1: i32) -> (i32, i32) {
    %c0_i32 = arith.constant 0 : i32
    %c0_i32_0 = arith.constant 0 : i32
    %c0_i32_1 = arith.constant 0 : i32
    return %c0_i32, %c0_i32_0 : i32, i32
  }
  func.func @transform_7(%arg0: i32, %arg1: i32) -> (i32, i32) {
    %c0_i32 = arith.constant 0 : i32
    %c0_i32_0 = arith.constant 0 : i32
    %c0_i32_1 = arith.constant 0 : i32
    return %c0_i32, %c0_i32_0 : i32, i32
  }
  func.func @transform_8(%arg0: i32, %arg1: i32) -> (i32, i32, i32) {
    %c0_i32 = arith.constant 0 : i32
    %c0_i32_0 = arith.constant 0 : i32
    return %arg0, %arg1, %c0_i32 : i32, i32, i32
  }
}

</mosaic_0001>

<llo_original>
// kernel: tpu_custom_call.1
$region0: #{tpu_custom_call.1}
  #allocation0 [shape = 'u32[]', space=smem, size = 0x4, offset = 0x4, fixed_abs, tag = 'smem constant byte address 0x4 - core index']
  #allocation1 [shape = 'u32[144,128]{1,0:T(1,128)}', space=vmem, size = 0x12000, scoped, tag = 'internal scratch']
  #allocation2 [shape = 'bf16[8,32]{1,0:T(8,128)(2,1)}', space=vmem, size = 0x800, scoped, tag = 'scratch operand']
  %s0 = inlined_call_operand.vmem [shape: f32[2,3,8], index: 0, kind: input, shape index: {}]
  %s1 = inlined_call_operand.vmem [shape: f32[2,16,3], index: 1, kind: input, shape index: {}]
  %s2 = inlined_call_operand.vmem [shape: bf16[2,8,16], index: 2, kind: input, shape index: {}]
  %s3 = inlined_call_operand.vmem [shape: bf16[2,16,32], index: 3, kind: input, shape index: {}]
  %s4 = inlined_call_operand.vmem [shape: bf16[16,32], index: 4, kind: input, shape index: {}]
  %s5 = inlined_call_operand.vmem [shape: f32[1,32], index: 5, kind: input, shape index: {}]
  %s6 = inlined_call_operand.vmem [shape: bf16[32,32], index: 6, kind: input, shape index: {}]
  %s7 = inlined_call_operand.vmem [shape: f32[1,32], index: 7, kind: input, shape index: {}]
  %s8 = inlined_call_operand.hbm [shape: f32[2,16,32], index: 8, kind: output, shape index: {}]
  %s9 = sld [smem:[#allocation0]]
  $region69: #{tpu_custom_call.1} parent=0
    _
  %s11 = ssub.s32 1, %s9
  %s12 = scalar_select 0, %s11, %s9
  $region1: #{tpu_custom_call.1} parent=0
    #allocation3 [shape = 'u8[16384]{0}', space=vmem, size = 0x4000, scoped, tag = 'output window, operand 0']
    #allocation4 [shape = 's32[2]{0}', space=sflag, size = 0x8, scoped, tag = 'scoped memory for tpu_custom_call.1']
    %13 = vsyncpa [#allocation4], 0
    %s14 = scalar_lea.sflag [#allocation4], 1
    %15 = vsyncpa %s14, 0
    loop: start=0, step=1, limit=4
    $region2: #{tpu_custom_call.1} parent=1 // loop_pre_header
      _
    $region3: #{tpu_custom_call.1} parent=1 // loop_header
      %s17 = sphi 0, %s21
      %p18 = scmp.ge.s32.totalorder %s17, 4
      %s24 = sphi 0, %s36
      %s25 = sphi 0, %s32
      %s26 = sphi 0, %s24
      %s27 = sphi 0, %s25
      %s28 = sphi 0, %s26
      %s29 = sphi 0, %s27
      %s39 = sphi 0, %s41
      %s42 = sphi 0, %s39
      %s43 = sphi 0, %s42
      %s59 = sphi 0, %s43
      %s67 = sphi 0, %s69
      %s70 = sphi 0, %s67
      %s71 = sphi 0, %s70
      %s87 = sphi 0, %s71
      %s93 = sphi 0, %s95
      %s96 = sphi 0, %s93
      %s97 = sphi 0, %s96
      %s113 = sphi 0, %s97
      %s121 = sphi 0, %s123
      %s124 = sphi 0, %s121
      %s125 = sphi 0, %s124
      %s141 = sphi 0, %s125
      %s145 = sphi 0, %s145
      %s147 = sphi 0, %s145
      %s148 = sphi 0, %s147
      %s162 = sphi 0, %s148
      %s166 = sphi 0, %s166
      %s168 = sphi 0, %s166
      %s169 = sphi 0, %s168
      %s183 = sphi 0, %s169
      %s187 = sphi 0, %s187
      %s189 = sphi 0, %s187
      %s190 = sphi 0, %s189
      %s204 = sphi 0, %s190
      %s208 = sphi 0, %s208
      %s210 = sphi 0, %s208
      %s211 = sphi 0, %s210
      %s225 = sphi 0, %s211
      %s233 = sphi 0, %s235
      %s236 = sphi 0, %s233
      %s237 = sphi 0, %s236
      %s253 = sphi 0, %s237
    $region4: #{tpu_custom_call.1} parent=1 // loop_header_branch
      %20 = sbr.rel (%p18) target = $region8
    $region5: #{tpu_custom_call.1} parent=1 // loop_body
      %s22 = ssub.s32 %s17, 1
      %s23 = ssub.s32 %s17, 2
      %s30 = sadd.s32 1, %s25
      %p31 = scmp.ge.s32.totalorder %s30, 1
      %s32 = scalar_select %p31, 0, %s30
      %s33 = sadd.s32 1, %s24
      %s34 = scalar_select %p31, %s33, %s24
      %p35 = scmp.ge.s32.totalorder %s34, 2
      %s36 = scalar_select %p35, 0, %s34
      %s37 = ssub.s32 %s24, %s36
      %p38 = scmp.eq.s32.totalorder %s37, 0
      %s40 = sadd.s32 %s39, 1
      %s41 = scalar_select %p38, %s39, %s40
      %p44 = pneg %p38
      %p45 = scmp.eq.s32.totalorder %s17, 1
      %p46 = por %p44, %p45
      %p47 = scmp.ne.s32.totalorder %s39, %s42
      %p48 = scmp.eq.s32.totalorder %s17, 0
      %p49 = por %p47, %p48
      %p50 = scmp.ne.s32.totalorder %s39, %s42
      %p51 = scmp.eq.s32.totalorder %s22, 1
      %p52 = por %p50, %p51
      %p53 = scmp.ne.s32.totalorder %s42, %s43
      %p54 = scmp.eq.s32.totalorder %s22, 0
      %p55 = por %p53, %p54
      %p56 = scmp.ne.s32.totalorder %s42, %s43
      %p57 = scmp.eq.s32.totalorder %s23, 1
      %p58 = por %p56, %p57
      %p60 = scmp.ne.s32.totalorder %s43, %s59
      %p61 = scmp.eq.s32.totalorder %s23, 0
      %p62 = por %p60, %p61
      %s63 = ssub.s32 %s24, %s36
      %s64 = ssub.s32 %s25, %s32
      %s65 = sor.u32 %s63, %s64
      %p66 = scmp.eq.s32.totalorder %s65, 0
      %s68 = sadd.s32 %s67, 1
      %s69 = scalar_select %p66, %s67, %s68
      %p72 = pneg %p66
      %p73 = scmp.eq.s32.totalorder %s17, 1
      %p74 = por %p72, %p73
      %p75 = scmp.ne.s32.totalorder %s67, %s70
      %p76 = scmp.eq.s32.totalorder %s17, 0
      %p77 = por %p75, %p76
      %p78 = scmp.ne.s32.totalorder %s67, %s70
      %p79 = scmp.eq.s32.totalorder %s22, 1
      %p80 = por %p78, %p79
      %p81 = scmp.ne.s32.totalorder %s70, %s71
      %p82 = scmp.eq.s32.totalorder %s22, 0
      %p83 = por %p81, %p82
      %p84 = scmp.ne.s32.totalorder %s70, %s71
      %p85 = scmp.eq.s32.totalorder %s23, 1
      %p86 = por %p84, %p85
      %p88 = scmp.ne.s32.totalorder %s71, %s87
      %p89 = scmp.eq.s32.totalorder %s23, 0
      %p90 = por %p88, %p89
      %s91 = ssub.s32 %s24, %s36
      %p92 = scmp.eq.s32.totalorder %s91, 0
      %s94 = sadd.s32 %s93, 1
      %s95 = scalar_select %p92, %s93, %s94
      %p98 = pneg %p92
      %p99 = scmp.eq.s32.totalorder %s17, 1
      %p100 = por %p98, %p99
      %p101 = scmp.ne.s32.totalorder %s93, %s96
      %p102 = scmp.eq.s32.totalorder %s17, 0
      %p103 = por %p101, %p102
      %p104 = scmp.ne.s32.totalorder %s93, %s96
      %p105 = scmp.eq.s32.totalorder %s22, 1
      %p106 = por %p104, %p105
      %p107 = scmp.ne.s32.totalorder %s96, %s97
      %p108 = scmp.eq.s32.totalorder %s22, 0
      %p109 = por %p107, %p108
      %p110 = scmp.ne.s32.totalorder %s96, %s97
      %p111 = scmp.eq.s32.totalorder %s23, 1
      %p112 = por %p110, %p111
      %p114 = scmp.ne.s32.totalorder %s97, %s113
      %p115 = scmp.eq.s32.totalorder %s23, 0
      %p116 = por %p114, %p115
      %s117 = ssub.s32 %s24, %s36
      %s118 = ssub.s32 %s25, %s32
      %s119 = sor.u32 %s117, %s118
      %p120 = scmp.eq.s32.totalorder %s119, 0
      %s122 = sadd.s32 %s121, 1
      %s123 = scalar_select %p120, %s121, %s122
      %p126 = pneg %p120
      %p127 = scmp.eq.s32.totalorder %s17, 1
      %p128 = por %p126, %p127
      %p129 = scmp.ne.s32.totalorder %s121, %s124
      %p130 = scmp.eq.s32.totalorder %s17, 0
      %p131 = por %p129, %p130
      %p132 = scmp.ne.s32.totalorder %s121, %s124
      %p133 = scmp.eq.s32.totalorder %s22, 1
      %p134 = por %p132, %p133
      %p135 = scmp.ne.s32.totalorder %s124, %s125
      %p136 = scmp.eq.s32.totalorder %s22, 0
      %p137 = por %p135, %p136
      %p138 = scmp.ne.s32.totalorder %s124, %s125
      %p139 = scmp.eq.s32.totalorder %s23, 1
      %p140 = por %p138, %p139
      %p142 = scmp.ne.s32.totalorder %s125, %s141
      %p143 = scmp.eq.s32.totalorder %s23, 0
      %p144 = por %p142, %p143
      %s146 = sadd.s32 %s145, 1
      %p149 = scmp.eq.s32.totalorder %s17, 1
      %p150 = scmp.ne.s32.totalorder %s145, %s147
      %p151 = scmp.eq.s32.totalorder %s17, 0
      %p152 = por %p150, %p151
      %p153 = scmp.ne.s32.totalorder %s145, %s147
      %p154 = scmp.eq.s32.totalorder %s22, 1
      %p155 = por %p153, %p154
      %p156 = scmp.ne.s32.totalorder %s147, %s148
      %p157 = scmp.eq.s32.totalorder %s22, 0
      %p158 = por %p156, %p157
      %p159 = scmp.ne.s32.totalorder %s147, %s148
      %p160 = scmp.eq.s32.totalorder %s23, 1
      %p161 = por %p159, %p160
      %p163 = scmp.ne.s32.totalorder %s148, %s162
      %p164 = scmp.eq.s32.totalorder %s23, 0
      %p165 = por %p163, %p164
      %s167 = sadd.s32 %s166, 1
      %p170 = scmp.eq.s32.totalorder %s17, 1
      %p171 = scmp.ne.s32.totalorder %s166, %s168
      %p172 = scmp.eq.s32.totalorder %s17, 0
      %p173 = por %p171, %p172
      %p174 = scmp.ne.s32.totalorder %s166, %s168
      %p175 = scmp.eq.s32.totalorder %s22, 1
      %p176 = por %p174, %p175
      %p177 = scmp.ne.s32.totalorder %s168, %s169
      %p178 = scmp.eq.s32.totalorder %s22, 0
      %p179 = por %p177, %p178
      %p180 = scmp.ne.s32.totalorder %s168, %s169
      %p181 = scmp.eq.s32.totalorder %s23, 1
      %p182 = por %p180, %p181
      %p184 = scmp.ne.s32.totalorder %s169, %s183
      %p185 = scmp.eq.s32.totalorder %s23, 0
      %p186 = por %p184, %p185
      %s188 = sadd.s32 %s187, 1
      %p191 = scmp.eq.s32.totalorder %s17, 1
      %p192 = scmp.ne.s32.totalorder %s187, %s189
      %p193 = scmp.eq.s32.totalorder %s17, 0
      %p194 = por %p192, %p193
      %p195 = scmp.ne.s32.totalorder %s187, %s189
      %p196 = scmp.eq.s32.totalorder %s22, 1
      %p197 = por %p195, %p196
      %p198 = scmp.ne.s32.totalorder %s189, %s190
      %p199 = scmp.eq.s32.totalorder %s22, 0
      %p200 = por %p198, %p199
      %p201 = scmp.ne.s32.totalorder %s189, %s190
      %p202 = scmp.eq.s32.totalorder %s23, 1
      %p203 = por %p201, %p202
      %p205 = scmp.ne.s32.totalorder %s190, %s204
      %p206 = scmp.eq.s32.totalorder %s23, 0
      %p207 = por %p205, %p206
      %s209 = sadd.s32 %s208, 1
      %p212 = scmp.eq.s32.totalorder %s17, 1
      %p213 = scmp.ne.s32.totalorder %s208, %s210
      %p214 = scmp.eq.s32.totalorder %s17, 0
      %p215 = por %p213, %p214
      %p216 = scmp.ne.s32.totalorder %s208, %s210
      %p217 = scmp.eq.s32.totalorder %s22, 1
      %p218 = por %p216, %p217
      %p219 = scmp.ne.s32.totalorder %s210, %s211
      %p220 = scmp.eq.s32.totalorder %s22, 0
      %p221 = por %p219, %p220
      %p222 = scmp.ne.s32.totalorder %s210, %s211
      %p223 = scmp.eq.s32.totalorder %s23, 1
      %p224 = por %p222, %p223
      %p226 = scmp.ne.s32.totalorder %s211, %s225
      %p227 = scmp.eq.s32.totalorder %s23, 0
      %p228 = por %p226, %p227
      %s229 = ssub.s32 %s24, %s36
      %s230 = ssub.s32 %s25, %s32
      %s231 = sor.u32 %s229, %s230
      %p232 = scmp.eq.s32.totalorder %s231, 0
      %s234 = sadd.s32 %s233, 1
      %s235 = scalar_select %p232, %s233, %s234
      %p238 = pneg %p232
      %p239 = scmp.eq.s32.totalorder %s17, 1
      %p240 = por %p238, %p239
      %p241 = scmp.ne.s32.totalorder %s233, %s236
      %p242 = scmp.eq.s32.totalorder %s17, 0
      %p243 = por %p241, %p242
      %p244 = scmp.ne.s32.totalorder %s233, %s236
      %p245 = scmp.eq.s32.totalorder %s22, 1
      %p246 = por %p244, %p245
      %p247 = scmp.ne.s32.totalorder %s236, %s237
      %p248 = scmp.eq.s32.totalorder %s22, 0
      %p249 = por %p247, %p248
      %p250 = scmp.ne.s32.totalorder %s236, %s237
      %p251 = scmp.eq.s32.totalorder %s23, 1
      %p252 = por %p250, %p251
      %p254 = scmp.ne.s32.totalorder %s237, %s253
      %p255 = scmp.eq.s32.totalorder %s23, 0
      %p256 = por %p254, %p255
      %p257 = scmp.le.s32.totalorder 1, %s17
      %p258 = scmp.lt.s32.totalorder %s17, 3
      %p259 = pnand %p257, %p258
      %p260 = pneg %p259
      // Predicated region
      $region9: #{tpu_custom_call.1} parent=5 // pred_check
        _
      $region10: #{tpu_custom_call.1} parent=5 // pred_check_branch
        %262 = sbr.rel (%p259) target = $region12
      $region11: #{tpu_custom_call.1} parent=5 // pred_region
        %s263 = ssub.s32 %s17, 1
        // Predicated region
        $region13: #{tpu_custom_call.1} parent=11 // pred_check
          %p264 = pneg %p158
        $region14: #{tpu_custom_call.1} parent=11 // pred_check_branch
          %266 = sbr.rel (%p264) target = $region16
        $region15: #{tpu_custom_call.1} parent=11 // pred_region
          _
        $region16: #{tpu_custom_call.1} parent=11 // pred_fallthru
          _
        // Predicated region
        $region17: #{tpu_custom_call.1} parent=11 // pred_check
          %p267 = pneg %p179
        $region18: #{tpu_custom_call.1} parent=11 // pred_check_branch
          %269 = sbr.rel (%p267) target = $region20
        $region19: #{tpu_custom_call.1} parent=11 // pred_region
          _
        $region20: #{tpu_custom_call.1} parent=11 // pred_fallthru
          _
        // Predicated region
        $region21: #{tpu_custom_call.1} parent=11 // pred_check
          %p270 = pneg %p200
        $region22: #{tpu_custom_call.1} parent=11 // pred_check_branch
          %272 = sbr.rel (%p270) target = $region24
        $region23: #{tpu_custom_call.1} parent=11 // pred_region
          _
        $region24: #{tpu_custom_call.1} parent=11 // pred_fallthru
          _
        // Predicated region
        $region25: #{tpu_custom_call.1} parent=11 // pred_check
          %p273 = pneg %p221
        $region26: #{tpu_custom_call.1} parent=11 // pred_check_branch
          %275 = sbr.rel (%p273) target = $region28
        $region27: #{tpu_custom_call.1} parent=11 // pred_region
          _
        $region28: #{tpu_custom_call.1} parent=11 // pred_fallthru
          _
      $region12: #{tpu_custom_call.1} parent=5 // pred_fallthru
        _
      %p276 = scmp.lt.s32.totalorder %s17, 2
      // Predicated region
      $region29: #{tpu_custom_call.1} parent=5 // pred_check
        %p277 = pneg %p276
      $region30: #{tpu_custom_call.1} parent=5 // pred_check_branch
        %279 = sbr.rel (%p277) target = $region32
      $region31: #{tpu_custom_call.1} parent=5 // pred_region
        // Predicated region
        $region33: #{tpu_custom_call.1} parent=31 // pred_check
          %p280 = pneg %p49
        $region34: #{tpu_custom_call.1} parent=31 // pred_check_branch
          %282 = sbr.rel (%p280) target = $region36
        $region35: #{tpu_custom_call.1} parent=31 // pred_region
          %p283 = scmp.lt.s32.totalorder %s24, 1
          %s284 = scalar_select %p283, %s24, 1
          %s285 = smul.addr %s284, 4
          %s286 = scalar_lea.vmem %s0, %s285
        $region36: #{tpu_custom_call.1} parent=31 // pred_fallthru
          _
        // Predicated region
        $region37: #{tpu_custom_call.1} parent=31 // pred_check
          %p287 = pneg %p77
        $region38: #{tpu_custom_call.1} parent=31 // pred_check_branch
          %289 = sbr.rel (%p287) target = $region40
        $region39: #{tpu_custom_call.1} parent=31 // pred_region
          %s290 = smul.u32 2, %s25
          %p291 = scmp.lt.s32.totalorder %s24, 1
          %s292 = scalar_select %p291, %s24, 1
          %p293 = scmp.lt.s32.totalorder %s290, 1
          %s294 = scalar_select %p293, %s290, 1
          %s295 = smul.addr %s292, 2
          %s296 = sadd.s32 %s294, %s295
          %s297 = smul.addr %s296, 8
          %s298 = scalar_lea.vmem %s1, %s297
          %s299 = smul.u32 2, %s25
        $region40: #{tpu_custom_call.1} parent=31 // pred_fallthru
          _
        // Predicated region
        $region41: #{tpu_custom_call.1} parent=31 // pred_check
          %p300 = pneg %p103
        $region42: #{tpu_custom_call.1} parent=31 // pred_check_branch
          %302 = sbr.rel (%p300) target = $region44
        $region43: #{tpu_custom_call.1} parent=31 // pred_region
          %p303 = scmp.lt.s32.totalorder %s24, 1
          %s304 = scalar_select %p303, %s24, 1
          %s305 = smul.addr %s304, 4
          %s306 = scalar_lea.vmem %s2, %s305
        $region44: #{tpu_custom_call.1} parent=31 // pred_fallthru
          _
        // Predicated region
        $region45: #{tpu_custom_call.1} parent=31 // pred_check
          %p307 = pneg %p131
        $region46: #{tpu_custom_call.1} parent=31 // pred_check_branch
          %309 = sbr.rel (%p307) target = $region48
        $region47: #{tpu_custom_call.1} parent=31 // pred_region
          %s310 = smul.u32 2, %s25
          %p311 = scmp.lt.s32.totalorder %s24, 1
          %s312 = scalar_select %p311, %s24, 1
          %p313 = scmp.lt.s32.totalorder %s310, 1
          %s314 = scalar_select %p313, %s310, 1
          %s315 = smul.addr %s312, 2
          %s316 = sadd.s32 %s314, %s315
          %s317 = smul.addr %s316, 4
          %s318 = scalar_lea.vmem %s3, %s317
          %s319 = smul.u32 2, %s25
        $region48: #{tpu_custom_call.1} parent=31 // pred_fallthru
          _
      $region32: #{tpu_custom_call.1} parent=5 // pred_fallthru
        _
      %p320 = scmp.le.s32.totalorder 1, %s17
      %p321 = scmp.lt.s32.totalorder %s17, 3
      %p322 = pnand %p320, %p321
      %p323 = pneg %p322
      // Predicated region
      $region49: #{tpu_custom_call.1} parent=5 // pred_check
        _
      $region50: #{tpu_custom_call.1} parent=5 // pred_check_branch
        %325 = sbr.rel (%p322) target = $region52
      $region51: #{tpu_custom_call.1} parent=5 // pred_region
        %s326 = ssub.s32 %s17, 1
        %p327 = scmp.lt.s32.totalorder %s26, 1
        %s328 = scalar_select %p327, %s26, 1
        %s329 = smul.addr %s328, 4
        %s330 = scalar_lea.vmem %s0, %s329
        %p331 = pneg %p55
        %p332 = pneg %p52
        %s333 = smul.u32 2, %s27
        %p334 = scmp.lt.s32.totalorder %s26, 1
        %s335 = scalar_select %p334, %s26, 1
        %p336 = scmp.lt.s32.totalorder %s333, 1
        %s337 = scalar_select %p336, %s333, 1
        %s338 = smul.addr %s335, 2
        %s339 = sadd.s32 %s337, %s338
        %s340 = smul.addr %s339, 8
        %s341 = scalar_lea.vmem %s1, %s340
        %p342 = pneg %p83
        %p343 = pneg %p80
        %p344 = scmp.lt.s32.totalorder %s26, 1
        %s345 = scalar_select %p344, %s26, 1
        %s346 = smul.addr %s345, 4
        %s347 = scalar_lea.vmem %s2, %s346
        %p348 = pneg %p109
        %p349 = pneg %p106
        %s350 = smul.u32 2, %s27
        %p351 = scmp.lt.s32.totalorder %s26, 1
        %s352 = scalar_select %p351, %s26, 1
        %p353 = scmp.lt.s32.totalorder %s350, 1
        %s354 = scalar_select %p353, %s350, 1
        %s355 = smul.addr %s352, 2
        %s356 = sadd.s32 %s354, %s355
        %s357 = smul.addr %s356, 4
        %s358 = scalar_lea.vmem %s3, %s357
        %p359 = pneg %p137
        %p360 = pneg %p134
        %p361 = pneg %p158
        %p362 = pneg %p155
        %p363 = pneg %p179
        %p364 = pneg %p176
        %p365 = pneg %p200
        %p366 = pneg %p197
        %p367 = pneg %p221
        %p368 = pneg %p218
        %p369 = pneg %p249
        %p370 = pneg %p246
        %s371 = sand.u32 %s236, 1
        %s372 = scalar_lea.sflag [#allocation4], %s371
        %s373 = sand.u32 %s236, 1
        %s374 = smul.addr %s373, 16
        %s375 = scalar_lea.vmem [#allocation3], %s374
        %p376 = scmp.lt.s32.totalorder %s26, 1
        %s377 = scalar_select %p376, %s26, 1
        %s378 = smul.addr %s377, 4
        %s379 = scalar_lea.vmem %s0, %s378
        %s380 = smul.u32 2, %s27
        %p381 = scmp.lt.s32.totalorder %s26, 1
        %s382 = scalar_select %p381, %s26, 1
        %p383 = scmp.lt.s32.totalorder %s380, 1
        %s384 = scalar_select %p383, %s380, 1
        %s385 = smul.addr %s382, 2
        %s386 = sadd.s32 %s384, %s385
        %s387 = smul.addr %s386, 8
        %s388 = scalar_lea.vmem %s1, %s387
        %s389 = smul.u32 2, %s27
        %p390 = scmp.lt.s32.totalorder %s26, 1
        %s391 = scalar_select %p390, %s26, 1
        %s392 = smul.addr %s391, 4
        %s393 = scalar_lea.vmem %s2, %s392
        %s394 = smul.u32 2, %s27
        %p395 = scmp.lt.s32.totalorder %s26, 1
        %s396 = scalar_select %p395, %s26, 1
        %p397 = scmp.lt.s32.totalorder %s394, 1
        %s398 = scalar_select %p397, %s394, 1
        %s399 = smul.addr %s396, 2
        %s400 = sadd.s32 %s398, %s399
        %s401 = smul.addr %s400, 4
        %s402 = scalar_lea.vmem %s3, %s401
        %s403 = smul.u32 2, %s27
        %s404 = smul.u32 2, %s27
        %p406 = scmp.eq.s32.totalorder %s27, 0
        // Predicated region
        $region53: #{tpu_custom_call.1} parent=51 // pred_check
          %p407 = pneg %p406
        $region54: #{tpu_custom_call.1} parent=51 // pred_check_branch
          %409 = sbr.rel (%p407) target = $region56
        $region55: #{tpu_custom_call.1} parent=51 // pred_region
          %v410 = vld [vmem:[%s393] sm:$0xf]
          %v411 = vld [vmem:[%s4] sm:$0xf]
          %v412 = vld [vmem:[%s4 + $0x4] sm:$0xf]
          %v413 = vld [vmem:[%s5] sm:$0x1]
          %v415 = vlaneseq
          %v416 = vshrl.u32 %v415, 7
          %v417 = vsub.s32 0, %v416
          %v418 = vrot.slane %v413, %v417
          %v422 = vunpack.c.l.b16 %v411
          %v423 = vunpack.c.l.b16 %v412
          %v424 = vpack.c.b16 %v423, %v422
          %vm426 = vcmask 130048
          %v428 = vsel %vm426, %v410, 0
          %430 = vmatprep.subr.bf16.mxu0 0
          %431 = vmatpush1.bf16.msra.mxu0 %v424
          %432 = vmatprep.subr.bf16.mxu0 0
          %433 = vmatpush1.bf16.msra.mxu0 0
          %434 = vmatprep.subr.bf16.mxu0 0
          %435 = vmatpush1.bf16.msra.mxu0 0
          %436 = vmatprep.subr.bf16.mxu0 0
          %437 = vmatpush1.bf16.msra.mxu0 0
          %438 = vmatprep.subr.bf16.mxu0 0
          %439 = vmatpush1.bf16.msra.mxu0 0
          %440 = vmatprep.subr.bf16.mxu0 0
          %441 = vmatpush1.bf16.msra.mxu0 0
          %442 = vmatprep.subr.bf16.mxu0 0
          %443 = vmatpush1.bf16.msra.mxu0 0
          %444 = vmatprep.subr.bf16.mxu0 0
          %445 = vmatpush1.bf16.msra.mxu0 0
          %446 = vmatprep.subr.bf16.mxu0 0
          %447 = vmatpush1.bf16.msra.mxu0 0
          %448 = vmatprep.subr.bf16.mxu0 0
          %449 = vmatpush1.bf16.msra.mxu0 0
          %450 = vmatprep.subr.bf16.mxu0 0
          %451 = vmatpush1.bf16.msra.mxu0 0
          %452 = vmatprep.subr.bf16.mxu0 0
          %453 = vmatpush1.bf16.msra.mxu0 0
          %454 = vmatprep.subr.bf16.mxu0 0
          %455 = vmatpush1.bf16.msra.mxu0 0
          %456 = vmatprep.subr.bf16.mxu0 0
          %457 = vmatpush1.bf16.msra.mxu0 0
          %458 = vmatprep.subr.bf16.mxu0 0
          %459 = vmatpush1.bf16.msra.mxu0 0
          %460 = vmatprep.subr.bf16.mxu0 0
          %461 = vmatpush1.bf16.msra.mxu0 0
          %462 = vmatprep.mubr.bf16.mxu0 0
          %463 = vmatmul.mubr.bf16.gmra.mrb[0].mxu0 %v428
          %v464 = vpop.f32.mrb[0].mxu0
          %v465 = vadd.f32 %v418, %v464
          %v466 = vpop.f32.mrb[0].mxu0
          %v467 = vpop.f32.mrb[0].mxu0
          %v468 = vpop.f32.mrb[0].mxu0
          %469 = vdwg.mxu0
          %v470 = vmax.f32 %v465, 0.0
          %v471 = vpack.c.bf16 %v470, %v470
          %vm472 = vcmask 257024
          %473 = vst.msk [vmem:[#allocation2] sm:$0xf] %vm472, %v471
        $region56: #{tpu_custom_call.1} parent=51 // pred_fallthru
          _
        %v474 = vld [vmem:[%s402] sm:$0xf]
        %v475 = vld [vmem:[%s402 + $0x4] sm:$0xf]
        %v476 = vld [vmem:[%s6] sm:$0xf]
        %v477 = vld [vmem:[%s6 + $0x4] sm:$0xf]
        %v478 = vld [vmem:[%s6 + $0x8] sm:$0xf]
        %v479 = vld [vmem:[%s6 + $0xc] sm:$0xf]
        %v480 = vld [vmem:[%s7] sm:$0x1]
        %v482 = vlaneseq
        %v483 = vshrl.u32 %v482, 7
        %v484 = vsub.s32 0, %v483
        %v485 = vrot.slane %v480, %v484
        %v489 = vunpack.c.l.b16 %v474
        %v490 = vunpack.c.l.b16 %v475
        %v491 = vpack.c.b16 %v490, %v489
        %v496 = vunpack.c.l.b16 %v476
        %v497 = vunpack.c.l.b16 %v477
        %v498 = vunpack.c.l.b16 %v478
        %v499 = vunpack.c.l.b16 %v479
        %v500 = vpack.c.b16 %v497, %v496
        %v501 = vpack.c.b16 %v499, %v498
        %vm504 = vcmask 261120
        %v506 = vsel %vm504, %v491, 0
        %508 = vmatprep.subr.bf16.mxu0 0
        %509 = vmatpush1.bf16.msra.mxu0 %v500
        %510 = vmatprep.subr.bf16.mxu0 0
        %511 = vmatpush1.bf16.msra.mxu0 %v501
        %512 = vmatprep.subr.bf16.mxu0 0
        %513 = vmatpush1.bf16.msra.mxu0 0
        %514 = vmatprep.subr.bf16.mxu0 0
        %515 = vmatpush1.bf16.msra.mxu0 0
        %516 = vmatprep.subr.bf16.mxu0 0
        %517 = vmatpush1.bf16.msra.mxu0 0
        %518 = vmatprep.subr.bf16.mxu0 0
        %519 = vmatpush1.bf16.msra.mxu0 0
        %520 = vmatprep.subr.bf16.mxu0 0
        %521 = vmatpush1.bf16.msra.mxu0 0
        %522 = vmatprep.subr.bf16.mxu0 0
        %523 = vmatpush1.bf16.msra.mxu0 0
        %524 = vmatprep.subr.bf16.mxu0 0
        %525 = vmatpush1.bf16.msra.mxu0 0
        %526 = vmatprep.subr.bf16.mxu0 0
        %527 = vmatpush1.bf16.msra.mxu0 0
        %528 = vmatprep.subr.bf16.mxu0 0
        %529 = vmatpush1.bf16.msra.mxu0 0
        %530 = vmatprep.subr.bf16.mxu0 0
        %531 = vmatpush1.bf16.msra.mxu0 0
        %532 = vmatprep.subr.bf16.mxu0 0
        %533 = vmatpush1.bf16.msra.mxu0 0
        %534 = vmatprep.subr.bf16.mxu0 0
        %535 = vmatpush1.bf16.msra.mxu0 0
        %536 = vmatprep.subr.bf16.mxu0 0
        %537 = vmatpush1.bf16.msra.mxu0 0
        %538 = vmatprep.subr.bf16.mxu0 0
        %539 = vmatpush1.bf16.msra.mxu0 0
        %540 = vmatprep.mubr.bf16.mxu0 0
        %541 = vmatmul.mubr.bf16.gmra.mrb[0].mxu0 %v506
        %v542 = vpop.f32.mrb[0].mxu0
        %v543 = vadd.f32 %v485, %v542
        %v544 = vpop.f32.mrb[0].mxu0
        %v545 = vpop.f32.mrb[0].mxu0
        %v546 = vadd.f32 %v485, %v545
        %v547 = vpop.f32.mrb[0].mxu0
        %548 = vdwg.mxu0
        %v549 = vmax.f32 %v543, 0.0
        %v550 = vmax.f32 %v546, 0.0
        %v551 = vld [vmem:[%s379] sm:$0x7]
        %v552 = vld [vmem:[%s388] sm:$0xff]
        %v553 = vld [vmem:[%s388 + $0x8] sm:$0xff]
        %555 = vset.pattern.permute.xlu0 0
        %556 = vperm.xlu0 %555, %v552
        %v557 = vpop.permute.xlu0 %556
        %560 = vset.pattern.permute.xlu0 0
        %561 = vperm.xlu0 %560, %v553
        %v562 = vpop.permute.xlu0 %561
        %v564 = vlaneseq
        %v565 = vshrl.u32 %v564, 7
        %v566 = vsub.s32 0, %v565
        %v567 = vrot.slane %v551, %v566
        %v568 = vsub.f32 %v557, %v567
        %v569 = vsub.f32 %v562, %v567
        %v570 = vmul.f32 %v568, %v568
        %v571 = vmul.f32 %v569, %v569
        %572 = vset.pattern.permute.xlu0 1
        %573 = vperm.xlu0 %572, %v552
        %v574 = vpop.permute.xlu0 %573
        %576 = vset.pattern.permute.xlu0 1
        %577 = vperm.xlu0 %576, %v553
        %v578 = vpop.permute.xlu0 %577
        %v580 = vlaneseq
        %v581 = vshrl.u32 %v580, 7
        %v582 = vsub.s32 1, %v581
        %v583 = vrot.slane %v551, %v582
        %v584 = vsub.f32 %v574, %v583
        %v585 = vsub.f32 %v578, %v583
        %v586 = vmul.f32 %v584, %v584
        %v587 = vmul.f32 %v585, %v585
        %v588 = vadd.f32 %v570, %v586
        %v589 = vadd.f32 %v571, %v587
        %590 = vset.pattern.permute.xlu0 2
        %591 = vperm.xlu0 %590, %v552
        %v592 = vpop.permute.xlu0 %591
        %594 = vset.pattern.permute.xlu0 2
        %595 = vperm.xlu0 %594, %v553
        %v596 = vpop.permute.xlu0 %595
        %v598 = vlaneseq
        %v599 = vshrl.u32 %v598, 7
        %v600 = vsub.s32 2, %v599
        %v601 = vrot.slane %v551, %v600
        %v602 = vsub.f32 %v592, %v601
        %v603 = vsub.f32 %v596, %v601
        %v604 = vmul.f32 %v602, %v602
        %v605 = vmul.f32 %v603, %v603
        %v606 = vadd.f32 %v588, %v604
        %v607 = vadd.f32 %v589, %v605
        %v608 = vlaneseq
        %v609 = vand.u32 %v608, 127
        %v612 = vand.u32 %v606, 4294967288
        %v613 = vand.u32 %v607, 4294967288
        %v614 = vor.u32 %v612, %v609
        %v615 = vor.u32 %v613, %v609
        %vm616 = vcmask 64512
        %v617 = vsel %vm616, %v614, 2147483647
        %v618 = vand.u32 %v617, 65535
        %v619 = vshra.s32 %v617, 16
        %v620 = vcvt.s32.f32 %v618
        %v621 = vcvt.s32.f32 %v619
        %622 = vmin.xlane.f32.xlu0 %v621
        %v623 = vpop.xlane.xlu0 %622
        %vm624 = vcmp.eq.f32.partialorder %v621, %v623
        %v625 = vsel %vm624, %v620, inf
        %626 = vmin.xlane.f32.xlu0 %v625
        %v627 = vpop.xlane.xlu0 %626
        %v628 = vcvt.f32.s32 %v627
        %v629 = vcvt.f32.s32 %v623
        %v630 = vshll.u32 %v629, 16
        %v631 = vadd.s32 %v630, %v628
        %v632 = vsel %vm616, %v615, 2147483647
        %v633 = vand.u32 %v632, 65535
        %v634 = vshra.s32 %v632, 16
        %v635 = vcvt.s32.f32 %v633
        %v636 = vcvt.s32.f32 %v634
        %637 = vmin.xlane.f32.xlu0 %v636
        %v638 = vpop.xlane.xlu0 %637
        %vm639 = vcmp.eq.f32.partialorder %v636, %v638
        %v640 = vsel %vm639, %v635, inf
        %641 = vmin.xlane.f32.xlu0 %v640
        %v642 = vpop.xlane.xlu0 %641
        %v643 = vcvt.f32.s32 %v642
        %v644 = vcvt.f32.s32 %v638
        %v645 = vshll.u32 %v644, 16
        %v646 = vadd.s32 %v645, %v643
        %vm647 = vcmp.eq.s32.totalorder %v614, %v631
        %vm648 = vcmp.eq.s32.totalorder %v615, %v646
        %v649 = vand.u32 %v631, 4294967288
        %v650 = vand.u32 %v646, 4294967288
        %v653 = vadd.f32 %v649, 1e-08
        %v654 = vadd.f32 %v650, 1e-08
        %v655 = vrcp.pop %v653
        %v656 = vmul.f32 1.0, %v655
        %v657 = vrcp.pop %v654
        %v658 = vmul.f32 1.0, %v657
        %v659 = vsel %vm647, %v656, 0.0
        %v660 = vsel %vm648, %v658, 0.0
        %v661 = vadd.f32 %v659, 0.0
        %v662 = vadd.f32 %v660, 0.0
        %v663 = vsel %vm647, 2147483647, %v614
        %v664 = vsel %vm648, 2147483647, %v615
        %v665 = vsel %vm616, %v663, 2147483647
        %v666 = vand.u32 %v665, 65535
        %v667 = vshra.s32 %v665, 16
        %v668 = vcvt.s32.f32 %v666
        %v669 = vcvt.s32.f32 %v667
        %670 = vmin.xlane.f32.xlu0 %v669
        %v671 = vpop.xlane.xlu0 %670
        %vm672 = vcmp.eq.f32.partialorder %v669, %v671
        %v673 = vsel %vm672, %v668, inf
        %674 = vmin.xlane.f32.xlu0 %v673
        %v675 = vpop.xlane.xlu0 %674
        %v676 = vcvt.f32.s32 %v675
        %v677 = vcvt.f32.s32 %v671
        %v678 = vshll.u32 %v677, 16
        %v679 = vadd.s32 %v678, %v676
        %v680 = vsel %vm616, %v664, 2147483647
        %v681 = vand.u32 %v680, 65535
        %v682 = vshra.s32 %v680, 16
        %v683 = vcvt.s32.f32 %v681
        %v684 = vcvt.s32.f32 %v682
        %685 = vmin.xlane.f32.xlu0 %v684
        %v686 = vpop.xlane.xlu0 %685
        %vm687 = vcmp.eq.f32.partialorder %v684, %v686
        %v688 = vsel %vm687, %v683, inf
        %689 = vmin.xlane.f32.xlu0 %v688
        %v690 = vpop.xlane.xlu0 %689
        %v691 = vcvt.f32.s32 %v690
        %v692 = vcvt.f32.s32 %v686
        %v693 = vshll.u32 %v692, 16
        %v694 = vadd.s32 %v693, %v691
        %vm695 = vcmp.eq.s32.totalorder %v663, %v679
        %vm696 = vcmp.eq.s32.totalorder %v664, %v694
        %v697 = vand.u32 %v679, 4294967288
        %v698 = vand.u32 %v694, 4294967288
        %v701 = vadd.f32 %v697, 1e-08
        %v702 = vadd.f32 %v698, 1e-08
        %v703 = vrcp.pop %v701
        %v704 = vmul.f32 1.0, %v703
        %v705 = vrcp.pop %v702
        %v706 = vmul.f32 1.0, %v705
        %v707 = vsel %vm695, %v704, 0.0
        %v708 = vsel %vm696, %v706, 0.0
        %v709 = vadd.f32 %v661, %v707
        %v710 = vadd.f32 %v662, %v708
        %v711 = vsel %vm695, 2147483647, %v663
        %v712 = vsel %vm696, 2147483647, %v664
        %v713 = vsel %vm616, %v711, 2147483647
        %v714 = vand.u32 %v713, 65535
        %v715 = vshra.s32 %v713, 16
        %v716 = vcvt.s32.f32 %v714
        %v717 = vcvt.s32.f32 %v715
        %718 = vmin.xlane.f32.xlu0 %v717
        %v719 = vpop.xlane.xlu0 %718
        %vm720 = vcmp.eq.f32.partialorder %v717, %v719
        %v721 = vsel %vm720, %v716, inf
        %722 = vmin.xlane.f32.xlu0 %v721
        %v723 = vpop.xlane.xlu0 %722
        %v724 = vcvt.f32.s32 %v723
        %v725 = vcvt.f32.s32 %v719
        %v726 = vshll.u32 %v725, 16
        %v727 = vadd.s32 %v726, %v724
        %v728 = vsel %vm616, %v712, 2147483647
        %v729 = vand.u32 %v728, 65535
        %v730 = vshra.s32 %v728, 16
        %v731 = vcvt.s32.f32 %v729
        %v732 = vcvt.s32.f32 %v730
        %733 = vmin.xlane.f32.xlu0 %v732
        %v734 = vpop.xlane.xlu0 %733
        %vm735 = vcmp.eq.f32.partialorder %v732, %v734
        %v736 = vsel %vm735, %v731, inf
        %737 = vmin.xlane.f32.xlu0 %v736
        %v738 = vpop.xlane.xlu0 %737
        %v739 = vcvt.f32.s32 %v738
        %v740 = vcvt.f32.s32 %v734
        %v741 = vshll.u32 %v740, 16
        %v742 = vadd.s32 %v741, %v739
        %vm743 = vcmp.eq.s32.totalorder %v711, %v727
        %vm744 = vcmp.eq.s32.totalorder %v712, %v742
        %v745 = vand.u32 %v727, 4294967288
        %v746 = vand.u32 %v742, 4294967288
        %v749 = vadd.f32 %v745, 1e-08
        %v750 = vadd.f32 %v746, 1e-08
        %v751 = vrcp.pop %v749
        %v752 = vmul.f32 1.0, %v751
        %v753 = vrcp.pop %v750
        %v754 = vmul.f32 1.0, %v753
        %v755 = vsel %vm743, %v752, 0.0
        %v756 = vsel %vm744, %v754, 0.0
        %v757 = vadd.f32 %v709, %v755
        %v758 = vadd.f32 %v710, %v756
        %v759 = vsel %vm616, %v757, 0.0
        %760 = vadd.xlane.f32.xlu0 %v759
        %v761 = vpop.xlane.xlu0 %760
        %v762 = vsel %vm616, %v758, 0.0
        %763 = vadd.xlane.f32.xlu0 %v762
        %v764 = vpop.xlane.xlu0 %763
        %v765 = vrcp.pop %v761
        %v766 = vmul.f32 1.0, %v765
        %v767 = vrcp.pop %v764
        %v768 = vmul.f32 1.0, %v767
        %v769 = vpack.c.bf16 %v758, %v757
        %v770 = vld [vmem:[#allocation2] sm:$0xf]
        %v772 = vsel %vm616, %v769, 0
        %vm774 = vcmask 1043456
        %v776 = vsel %vm774, %v770, 0
        %778 = vmatprep.subr.bf16.mxu0 0
        %779 = vmatpush1.bf16.msra.mxu0 %v776
        %780 = vmatprep.subr.bf16.mxu0 0
        %781 = vmatpush1.bf16.msra.mxu0 0
        %782 = vmatprep.subr.bf16.mxu0 0
        %783 = vmatpush1.bf16.msra.mxu0 0
        %784 = vmatprep.subr.bf16.mxu0 0
        %785 = vmatpush1.bf16.msra.mxu0 0
        %786 = vmatprep.subr.bf16.mxu0 0
        %787 = vmatpush1.bf16.msra.mxu0 0
        %788 = vmatprep.subr.bf16.mxu0 0
        %789 = vmatpush1.bf16.msra.mxu0 0
        %790 = vmatprep.subr.bf16.mxu0 0
        %791 = vmatpush1.bf16.msra.mxu0 0
        %792 = vmatprep.subr.bf16.mxu0 0
        %793 = vmatpush1.bf16.msra.mxu0 0
        %794 = vmatprep.subr.bf16.mxu0 0
        %795 = vmatpush1.bf16.msra.mxu0 0
        %796 = vmatprep.subr.bf16.mxu0 0
        %797 = vmatpush1.bf16.msra.mxu0 0
        %798 = vmatprep.subr.bf16.mxu0 0
        %799 = vmatpush1.bf16.msra.mxu0 0
        %800 = vmatprep.subr.bf16.mxu0 0
        %801 = vmatpush1.bf16.msra.mxu0 0
        %802 = vmatprep.subr.bf16.mxu0 0
        %803 = vmatpush1.bf16.msra.mxu0 0
        %804 = vmatprep.subr.bf16.mxu0 0
        %805 = vmatpush1.bf16.msra.mxu0 0
        %806 = vmatprep.subr.bf16.mxu0 0
        %807 = vmatpush1.bf16.msra.mxu0 0
        %808 = vmatprep.subr.bf16.mxu0 0
        %809 = vmatpush1.bf16.msra.mxu0 0
        %810 = vmatprep.mubr.bf16.mxu0 0
        %811 = vmatmul.mubr.bf16.gmra.mrb[0].mxu0 %v772
        %v812 = vpop.f32.mrb[0].mxu0
        %v813 = vadd.f32 0.0, %v812
        %v814 = vpop.f32.mrb[0].mxu0
        %v815 = vpop.f32.mrb[0].mxu0
        %v816 = vadd.f32 0.0, %v815
        %v817 = vpop.f32.mrb[0].mxu0
        %818 = vdwg.mxu0
        %v819 = vmul.f32 %v813, %v766
        %v820 = vmul.f32 %v816, %v768
        %v821 = vadd.f32 %v819, %v549
        %v822 = vadd.f32 %v820, %v550
        %823 = vst.msk [vmem:[%s375] sm:$0xff] %vm504, %v821
        %824 = vst.msk [vmem:[%s375 + $0x8] sm:$0xff] %vm504, %v822
        %s825 = sand.u32 %s236, 1
        %s826 = scalar_lea.sflag [#allocation4], %s825
        %s827 = sand.u32 %s236, 1
        %s828 = smul.addr %s827, 16
        %s829 = scalar_lea.vmem [#allocation3], %s828
        // Predicated region
        $region57: #{tpu_custom_call.1} parent=51 // pred_check
          %p830 = pneg %p246
        $region58: #{tpu_custom_call.1} parent=51 // pred_check_branch
          %832 = sbr.rel (%p830) target = $region60
        $region59: #{tpu_custom_call.1} parent=51 // pred_region
          %s833 = smul.u32 2, %s27
          %s835 = ssub.s32 256, 256
          %836 = vsyncadd %s826, %s835
          %s837 = smul.addr %s26, 2
          %s838 = sadd.s32 %s833, %s837
          %s839 = smul.addr %s838, 128
          %s840 = scalar_lea.hbm %s8, %s839
          %s841 = sshll.u32 %s829, 4
          %s842 = int_to_ptr.vmem [resolvable:$true] %s841
          %847 = dma.vmem_to_hbm [thread:$0]  %s842, 256, %s840, %s826, 128, 128, 8
        $region60: #{tpu_custom_call.1} parent=51 // pred_fallthru
          _
      $region52: #{tpu_custom_call.1} parent=5 // pred_fallthru
        _
      %p848 = scmp.le.s32.totalorder 2, %s17
      // Predicated region
      $region61: #{tpu_custom_call.1} parent=5 // pred_check
        %p849 = pneg %p848
      $region62: #{tpu_custom_call.1} parent=5 // pred_check_branch
        %851 = sbr.rel (%p849) target = $region64
      $region63: #{tpu_custom_call.1} parent=5 // pred_region
        %s852 = ssub.s32 %s17, 2
        // Predicated region
        $region65: #{tpu_custom_call.1} parent=63 // pred_check
          %p853 = pneg %p252
        $region66: #{tpu_custom_call.1} parent=63 // pred_check_branch
          %855 = sbr.rel (%p853) target = $region68
        $region67: #{tpu_custom_call.1} parent=63 // pred_region
          %s856 = sand.u32 %s237, 1
          %s857 = scalar_lea.sflag [#allocation4], %s856
          %s858 = sand.u32 %s237, 1
          %s859 = smul.addr %s858, 16
          %s860 = scalar_lea.vmem [#allocation3], %s859
          %861 = dma.done %s857, 256
        $region68: #{tpu_custom_call.1} parent=63 // pred_fallthru
          _
      $region64: #{tpu_custom_call.1} parent=5 // pred_fallthru
        _
    $region6: #{tpu_custom_call.1} parent=1 // loop_footer
      %s21 = sadd.s32 1, %s17
    $region7: #{tpu_custom_call.1} parent=1 // loop_footer_branch
      %16 = sbr.rel target = $region3
    $region8: #{tpu_custom_call.1} parent=1 // loop_exit
      _
    %862 = vsyncpa [#allocation4], 1
    %s863 = scalar_lea.sflag [#allocation4], 1
    %864 = vsyncpa %s863, 1

</llo_original>
